<compile_context>
chip_gen: v6e
topology: v6e:2x2x1
jax: 0.10.0
libtpu: 0.0.40
codegen_flags: <defaults>
</compile_context>

<pallas_src>
import functools

import jax
import jax.numpy as jnp
from jax.experimental import pallas as pl
from jax.experimental.pallas import tpu as pltpu

_MiB = 1024 * 1024


def _round_up(n, m):
    return ((n + m - 1) // m) * m


def _cdiv(a, b):
    return (a + b - 1) // b


def _vmem_capacity_bytes():
    """Physical VMEM per TensorCore (falls back to the smallest, v7x's 64 MiB)."""
    try:
        info = pltpu.get_tpu_info()
        cap = getattr(info, "vmem_capacity_bytes", None)
        if cap:
            return int(cap)
    except Exception:
        pass
    return 64 * _MiB


# --------------------------------------------------------------------------
# Kernel
# --------------------------------------------------------------------------
def _ffn_kernel(x_ref, w1_ref, b1_ref, w2_ref, b2_ref, o_ref, *scratch,
                acc_in_output):
    """One (row-tile i, hidden-tile h) grid step of the fused MLP.

    x_ref:   (tm, E_pad)   native x dtype (cast to compute dtype in-kernel)
    w1_ref:  (E_pad, th)   compute dtype
    b1_ref:  (1, th)       f32
    w2_ref:  (th, E_pad)   compute dtype
    b2_ref:  (1, E_pad)    f32
    o_ref:   (tm, E_pad)   output dtype (doubles as accumulator when f32)
    scratch: optional (tm, E_pad) f32 accumulator when output is not f32
    """
    h_idx = pl.program_id(1)
    acc_ref = o_ref if acc_in_output else scratch[0]

    @pl.when(h_idx == 0)
    def _init():
        acc_ref[...] = jnp.zeros_like(acc_ref)

    # First matmul on this hidden slice + bias + ReLU (f32 accumulate on MXU).
    x = x_ref[...].astype(w1_ref.dtype)
    h = jnp.dot(x, w1_ref[...], preferred_element_type=jnp.float32)
    h = jnp.maximum(h + b1_ref[...], 0.0)

    # Partial second matmul, accumulated over hidden slices.
    acc_ref[...] += jnp.dot(h.astype(w2_ref.dtype), w2_ref[...],
                            preferred_element_type=jnp.float32)

    @pl.when(h_idx == pl.num_programs(1) - 1)
    def _finalize():
        # b2 is added exactly once, at the final reduction step.
        if acc_in_output:
            o_ref[...] += b2_ref[...]
        else:
            o_ref[...] = (acc_ref[...] + b2_ref[...]).astype(o_ref.dtype)


# --------------------------------------------------------------------------
# One-time weight preparation (hoisted out of the per-call path)
# --------------------------------------------------------------------------
def prepare_params(w1, b1, w2, b2, *, compute_dtype=jnp.bfloat16):
    """Pad to lane-friendly extents and cast to the MXU compute dtype, once."""
    E, H = w1.shape
    E_pad = _round_up(E, 128)
    H_pad = _round_up(H, 128)
    w1_p = jnp.pad(w1, ((0, E_pad - E), (0, H_pad - H))).astype(compute_dtype)
    b1_p = jnp.pad(b1.reshape(1, -1), ((0, 0), (0, H_pad - H))).astype(jnp.float32)
    w2_p = jnp.pad(w2, ((0, H_pad - H), (0, E_pad - E))).astype(compute_dtype)
    b2_p = jnp.pad(b2.reshape(1, -1), ((0, 0), (0, E_pad - E))).astype(jnp.float32)
    return w1_p, b1_p, w2_p, b2_p


# --------------------------------------------------------------------------
# Tile / VMEM-budget selection (Python-level, per call-shape)
# --------------------------------------------------------------------------
def _select_tiles(M, E_pad, H_pad, x_dtype, compute_dtype, out_dtype, tm, th):
    vmem_phys = _vmem_capacity_bytes()
    if vmem_phys >= 96 * _MiB:            # v5e / v6e: 128 MiB physical
        cap = 108 * _MiB
    else:                                 # v7x: 64 MiB per TC
        cap = max(32 * _MiB, vmem_phys - 12 * _MiB)

    if tm is None:
        # Larger row tile => more FLOPs per streamed weight byte.
        tm = 768 if vmem_phys >= 96 * _MiB else 512
    if th is None:
        th = 256

    # th: multiple of 128 that divides H_pad.
    th = max(128, min(int(th), H_pad))
    th = (th // 128) * 128
    while H_pad % th != 0:
        th -= 128

    # tm: multiple of 16 sublanes, clamped so we never pad M by more than one tile.
    tm = max(16, min(int(tm), _round_up(M, 16)))
    tm = _round_up(tm, 16)

    xb = jnp.dtype(x_dtype).itemsize
    cb = jnp.dtype(compute_dtype).itemsize
    ob = jnp.dtype(out_dtype).itemsize
    acc_in_output = jnp.dtype(out_dtype) == jnp.float32

    def est(tm_, th_):
        return (2 * tm_ * E_pad * xb              # x tiles (double-buffered)
                + 2 * E_pad * th_ * cb            # W1 slice
                + 2 * th_ * E_pad * cb            # W2 slice
                + 2 * th_ * 4 + 2 * E_pad * 4     # biases
                + tm_ * th_ * (4 + cb)            # first-matmul intermediate + cast
                + 2 * tm_ * E_pad * ob            # output tiles
                + (0 if acc_in_output else tm_ * E_pad * 4))  # f32 accumulator

    # Auto-shrink tiles (th first, then tm) instead of exceeding the VMEM cap.
    while est(tm, th) > cap:
        if th > 128:
            new_th = th - 128
            while new_th > 128 and H_pad % new_th != 0:
                new_th -= 128
            th = max(128, new_th)
        elif tm > 128:
            tm = max(128, _round_up(tm // 2, 16))
        else:
            break

    # Megacore: keep >= 2 row tiles on the "parallel" axis for 2-TC chips.
    if M > 256 and _cdiv(M, tm) < 2:
        tm = _round_up(_cdiv(M, 2), 128)

    return tm, th, int(cap)


# --------------------------------------------------------------------------
# Forward pass
# --------------------------------------------------------------------------
@functools.partial(jax.jit, static_argnames=("tm", "th", "vmem_limit"))
def _ffn_call(x, w1_p, b1_p, w2_p, b2_p, *, tm, th, vmem_limit):
    B, T, E = x.shape
    M = B * T
    E_pad, H_pad = w1_p.shape
    out_dtype = x.dtype
    acc_in_output = jnp.dtype(out_dtype) == jnp.float32

    M_pad = _round_up(M, tm)
    x_p = jnp.pad(x.reshape(M, E), ((0, M_pad - M), (0, E_pad - E)))

    grid = (M_pad // tm, H_pad // th)
    kernel = functools.partial(_ffn_kernel, acc_in_output=acc_in_output)
    scratch = [] if acc_in_output else [pltpu.VMEM((tm, E_pad), jnp.float32)]

    xb = jnp.dtype(x.dtype).itemsize
    cb = jnp.dtype(w1_p.dtype).itemsize
    ob = jnp.dtype(out_dtype).itemsize
    cost = pl.CostEstimate(
        flops=int(4 * M * E_pad * H_pad),
        transcendentals=0,
        bytes_accessed=int(M_pad * E_pad * (xb + ob)
                           + (M_pad // tm) * 2 * E_pad * H_pad * cb),
    )

    out_p = pl.pallas_call(
        kernel,
        out_shape=jax.ShapeDtypeStruct((M_pad, E_pad), out_dtype),
        grid_spec=pltpu.PrefetchScalarGridSpec(
            num_scalar_prefetch=0,
            grid=grid,
            in_specs=[
                pl.BlockSpec((tm, E_pad), lambda i, h: (i, 0)),   # x rows (resident across h)
                pl.BlockSpec((E_pad, th), lambda i, h: (0, h)),   # W1 slice
                pl.BlockSpec((1, th),     lambda i, h: (0, h)),   # b1 slice
                pl.BlockSpec((th, E_pad), lambda i, h: (h, 0)),   # W2 slice
                pl.BlockSpec((1, E_pad),  lambda i, h: (0, 0)),   # b2
            ],
            out_specs=pl.BlockSpec((tm, E_pad), lambda i, h: (i, 0)),
            scratch_shapes=scratch,
        ),
        compiler_params=pltpu.CompilerParams(
            dimension_semantics=("parallel", "arbitrary"),
            vmem_limit_bytes=int(vmem_limit),
        ),
        cost_estimate=cost,
    )(x_p, w1_p, b1_p, w2_p, b2_p)

    # TODO(synk): training-mode dropout (pltpu.prng_*) not implemented; eval-mode
    # nn.Dropout is an identity, which is what we emit here.
    return out_p[:M, :E].reshape(B, T, E)


def feed_forward(x, w1_p, b1_p, w2_p, b2_p, *, tm=None, th=None):
    """x: [B, T, E] -> [B, T, E]. Weights must come from prepare_params()."""
    B, T, E = x.shape
    M = B * T
    E_pad, H_pad = w1_p.shape
    tm_eff, th_eff, vmem_limit = _select_tiles(
        M, E_pad, H_pad, x.dtype, w1_p.dtype, x.dtype, tm, th)
    return _ffn_call(x, w1_p, b1_p, w2_p, b2_p,
                     tm=tm_eff, th=th_eff, vmem_limit=vmem_limit)


def init_params(key, num_embed):
    """Deterministic init mimicking nn.Linear (uniform +-1/sqrt(fan_in))."""
    hidden = 4 * num_embed
    k1, k2, k3, k4 = jax.random.split(key, 4)
    bound1 = 1.0 / jnp.sqrt(num_embed)
    bound2 = 1.0 / jnp.sqrt(hidden)
    w1 = jax.random.uniform(k1, (num_embed, hidden), jnp.float32, -bound1, bound1)
    b1 = jax.random.uniform(k2, (1, hidden), jnp.float32, -bound1, bound1)
    w2 = jax.random.uniform(k3, (hidden, num_embed), jnp.float32, -bound2, bound2)
    b2 = jax.random.uniform(k4, (1, num_embed), jnp.float32, -bound2, bound2)
    return w1, b1, w2, b2


def _reference(x, w1, b1, w2, b2, compute_dtype=jnp.bfloat16):
    """Pure-JAX reference with matching bf16 MXU operands / f32 accumulation."""
    B, T, E = x.shape
    x2 = x.reshape(-1, E)
    h = jnp.maximum(
        jnp.dot(x2.astype(compute_dtype), w1.astype(compute_dtype),
                preferred_element_type=jnp.float32) + b1, 0.0)
    out = (jnp.dot(h.astype(compute_dtype), w2.astype(compute_dtype),
                   preferred_element_type=jnp.float32) + b2)
    return out.reshape(B, T, E)


if __name__ == "__main__":
    key = jax.random.PRNGKey(0)

    # --- Test 1: small config (batch=2, seq=8, num_embed=32 -> hidden=128) ---
    B, T, E = 2, 8, 32
    kx, kp, key = jax.random.split(key, 3)
    x = jax.random.normal(kx, (B, T, E), jnp.float32)
    w1, b1, w2, b2 = init_params(kp, E)
    params = prepare_params(w1, b1, w2, b2)

    out = jax.block_until_ready(feed_forward(x, *params))
    ref = _reference(x, w1, b1, w2, b2)
    assert out.shape == (B, T, E) and out.dtype == x.dtype
    assert jnp.allclose(out, ref.astype(x.dtype), atol=2e-2, rtol=2e-2), (
        float(jnp.max(jnp.abs(out - ref))))

    # --- Test 2: exercises multi-tile grid (row split + hidden reduction) ---
    B2, T2, E2 = 4, 160, 256
    kx2, kp2, key = jax.random.split(key, 3)
    x2 = jax.random.normal(kx2, (B2, T2, E2), jnp.float32)
    w1b, b1b, w2b, b2b = init_params(kp2, E2)
    params2 = prepare_params(w1b, b1b, w2b, b2b)

    out2 = jax.block_until_ready(feed_forward(x2, *params2))
    ref2 = _reference(x2, w1b, b1b, w2b, b2b)
    assert out2.shape == (B2, T2, E2) and out2.dtype == x2.dtype
    assert jnp.allclose(out2, ref2.astype(x2.dtype), atol=2e-2, rtol=2e-2), (
        float(jnp.max(jnp.abs(out2 - ref2))))

    print("KERNEL_OK")
</pallas_src>

<mosaic_0001>
module attributes {stable_mosaic.version = 11 : i64} {
  func.func @_ffn_kernel(%arg0: i32, %arg1: i32, %arg2: memref<16x128xf32, #tpu.memory_space<vmem>>, %arg3: memref<128x128xbf16, #tpu.memory_space<vmem>>, %arg4: memref<1x128xf32, #tpu.memory_space<vmem>>, %arg5: memref<128x128xbf16, #tpu.memory_space<vmem>>, %arg6: memref<1x128xf32, #tpu.memory_space<vmem>>, %arg7: memref<16x128xf32, #tpu.memory_space<vmem>>) attributes {dimension_semantics = [#tpu.dimension_semantics<parallel>, #tpu.dimension_semantics<arbitrary>], iteration_bounds = array<i64: 1, 1>, scalar_prefetch = 0 : i64, scratch_operands = 0 : i64, tpu.core_type = #tpu.core_type<tc>, window_params = [{transform_indices = @transform_0, window_bounds = array<i64: 16, 128>}, {transform_indices = @transform_1, window_bounds = array<i64: 128, 128>}, {transform_indices = @transform_2, window_bounds = array<i64: 1, 128>}, {transform_indices = @transform_3, window_bounds = array<i64: 128, 128>}, {pipeline_mode = #tpu.pipeline_mode<synchronous>, transform_indices = @transform_4, window_bounds = array<i64: 1, 128>}, {transform_indices = @transform_5, window_bounds = array<i64: 16, 128>}]} {
    %c0_i32 = arith.constant 0 : i32
    %0 = arith.cmpi eq, %arg1, %c0_i32 : i32
    %1 = arith.extui %0 : i1 to i32
    %c0_i32_0 = arith.constant 0 : i32
    %2 = arith.cmpi ne, %1, %c0_i32_0 : i32
    scf.if %2 {
      %cst_16 = arith.constant 0.000000e+00 : f32
      %21 = vector.broadcast %cst_16 : f32 to vector<16x128xf32>
      %c0_17 = arith.constant 0 : index
      %c0_18 = arith.constant 0 : index
      %22 = vector.load %arg7[%c0_17, %c0_18] : memref<16x128xf32, #tpu.memory_space<vmem>>, vector<16x128xf32>
      tpu.vector_store %arg7[%c0_17, %c0_18], %21 {strides = array<i32>} : memref<16x128xf32, #tpu.memory_space<vmem>>, vector<16x128xf32>,
    } else {
    }
    %c0 = arith.constant 0 : index
    %c0_1 = arith.constant 0 : index
    %3 = vector.load %arg2[%c0, %c0_1] : memref<16x128xf32, #tpu.memory_space<vmem>>, vector<16x128xf32>
    %4 = arith.truncf %3 : vector<16x128xf32> to vector<16x128xbf16>
    %c0_2 = arith.constant 0 : index
    %c0_3 = arith.constant 0 : index
    %5 = vector.load %arg3[%c0_2, %c0_3] : memref<128x128xbf16, #tpu.memory_space<vmem>>, vector<128x128xbf16>
    %cst = arith.constant dense<0.000000e+00> : vector<16x128xf32>
    %6 = tpu.matmul %4, %5, %cst {dimension_numbers = #tpu.dot_dimension_numbers<[1], [0], [0], [1], [0, 0, 1, 1], [], []>} : vector<16x128xbf16>, vector<128x128xbf16>, vector<16x128xf32> -> vector<16x128xf32>
    %c0_4 = arith.constant 0 : index
    %c0_5 = arith.constant 0 : index
    %7 = vector.load %arg4[%c0_4, %c0_5] : memref<1x128xf32, #tpu.memory_space<vmem>>, vector<1x128xf32>
    %8 = vector.broadcast %7 : vector<1x128xf32> to vector<16x128xf32>
    %9 = arith.addf %6, %8 : vector<16x128xf32>
    %cst_6 = arith.constant 0.000000e+00 : f32
    %10 = vector.broadcast %cst_6 : f32 to vector<16x128xf32>
    %11 = arith.maximumf %9, %10 : vector<16x128xf32>
    %c0_7 = arith.constant 0 : index
    %c0_8 = arith.constant 0 : index
    %12 = vector.load %arg7[%c0_7, %c0_8] : memref<16x128xf32, #tpu.memory_space<vmem>>, vector<16x128xf32>
    %13 = arith.truncf %11 : vector<16x128xf32> to vector<16x128xbf16>
    %c0_9 = arith.constant 0 : index
    %c0_10 = arith.constant 0 : index
    %14 = vector.load %arg5[%c0_9, %c0_10] : memref<128x128xbf16, #tpu.memory_space<vmem>>, vector<128x128xbf16>
    %cst_11 = arith.constant dense<0.000000e+00> : vector<16x128xf32>
    %15 = tpu.matmul %13, %14, %cst_11 {dimension_numbers = #tpu.dot_dimension_numbers<[1], [0], [0], [1], [0, 0, 1, 1], [], []>} : vector<16x128xbf16>, vector<128x128xbf16>, vector<16x128xf32> -> vector<16x128xf32>
    %16 = arith.addf %12, %15 : vector<16x128xf32>
    %c0_12 = arith.constant 0 : index
    %c0_13 = arith.constant 0 : index
    %17 = vector.load %arg7[%c0_12, %c0_13] : memref<16x128xf32, #tpu.memory_space<vmem>>, vector<16x128xf32>
    tpu.vector_store %arg7[%c0_12, %c0_13], %16 {strides = array<i32>} : memref<16x128xf32, #tpu.memory_space<vmem>>, vector<16x128xf32>,
    %c0_i32_14 = arith.constant 0 : i32
    %18 = arith.cmpi eq, %arg1, %c0_i32_14 : i32
    %19 = arith.extui %18 : i1 to i32
    %c0_i32_15 = arith.constant 0 : i32
    %20 = arith.cmpi ne, %19, %c0_i32_15 : i32
    scf.if %20 {
      %c0_16 = arith.constant 0 : index
      %c0_17 = arith.constant 0 : index
      %21 = vector.load %arg7[%c0_16, %c0_17] : memref<16x128xf32, #tpu.memory_space<vmem>>, vector<16x128xf32>
      %c0_18 = arith.constant 0 : index
      %c0_19 = arith.constant 0 : index
      %22 = vector.load %arg6[%c0_18, %c0_19] : memref<1x128xf32, #tpu.memory_space<vmem>>, vector<1x128xf32>
      %23 = vector.broadcast %22 : vector<1x128xf32> to vector<16x128xf32>
      %24 = arith.addf %21, %23 : vector<16x128xf32>
      %c0_20 = arith.constant 0 : index
      %c0_21 = arith.constant 0 : index
      %25 = vector.load %arg7[%c0_20, %c0_21] : memref<16x128xf32, #tpu.memory_space<vmem>>, vector<16x128xf32>
      tpu.vector_store %arg7[%c0_20, %c0_21], %24 {strides = array<i32>} : memref<16x128xf32, #tpu.memory_space<vmem>>, vector<16x128xf32>,
    } else {
    }
    return
  }
  func.func @transform_0(%arg0: i32, %arg1: i32) -> (i32, i32) {
    %c0_i32 = arith.constant 0 : i32
    %c0_i32_0 = arith.constant 0 : i32
    return %arg0, %c0_i32 : i32, i32
  }
  func.func @transform_1(%arg0: i32, %arg1: i32) -> (i32, i32) {
    %c0_i32 = arith.constant 0 : i32
    %c0_i32_0 = arith.constant 0 : i32
    return %c0_i32, %arg1 : i32, i32
  }
  func.func @transform_2(%arg0: i32, %arg1: i32) -> (i32, i32) {
    %c0_i32 = arith.constant 0 : i32
    %c0_i32_0 = arith.constant 0 : i32
    return %c0_i32, %arg1 : i32, i32
  }
  func.func @transform_3(%arg0: i32, %arg1: i32) -> (i32, i32) {
    %c0_i32 = arith.constant 0 : i32
    %c0_i32_0 = arith.constant 0 : i32
    return %arg1, %c0_i32 : i32, i32
  }
  func.func @transform_4(%arg0: i32, %arg1: i32) -> (i32, i32) {
    %c0_i32 = arith.constant 0 : i32
    %c0_i32_0 = arith.constant 0 : i32
    %c0_i32_1 = arith.constant 0 : i32
    return %c0_i32, %c0_i32_0 : i32, i32
  }
  func.func @transform_5(%arg0: i32, %arg1: i32) -> (i32, i32) {
    %c0_i32 = arith.constant 0 : i32
    %c0_i32_0 = arith.constant 0 : i32
    return %arg0, %c0_i32 : i32, i32
  }
}

</mosaic_0001>

<llo_original>
// kernel: _ffn_call.1
$region0: #{_ffn_call.1}
  #allocation0 [shape = 'u32[]', space=smem, size = 0x4, offset = 0x4, fixed_abs, tag = 'smem constant byte address 0x4 - core index']
  #allocation1 [shape = 'u32[144,128]{1,0:T(1,128)}', space=vmem, size = 0x12000, scoped, tag = 'internal scratch']
  %s0 = inlined_call_operand.vmem [shape: f32[16,128], index: 0, kind: input, shape index: {}]
  %s1 = inlined_call_operand.hbm [shape: bf16[128,128], index: 1, kind: input, shape index: {}]
  %s2 = inlined_call_operand.vmem [shape: f32[1,128], index: 2, kind: input, shape index: {}]
  %s3 = inlined_call_operand.hbm [shape: bf16[128,128], index: 3, kind: input, shape index: {}]
  %s4 = inlined_call_operand.vmem [shape: f32[1,128], index: 4, kind: input, shape index: {}]
  %s5 = inlined_call_operand.vmem [shape: f32[16,128], index: 5, kind: output, shape index: {}]
  %s6 = sld [smem:[#allocation0]]
  $region46: #{_ffn_call.1} parent=0
    _
  %s8 = ssub.s32 1, %s6
  %s9 = scalar_select 0, %s8, %s6
  $region1: #{_ffn_call.1} parent=0
    #allocation2 [shape = 'u8[32768]{0}', space=vmem, size = 0x8000, scoped, tag = 'input window, operand 1, single buffered']
    #allocation3 [shape = 's32[1]{0}', space=sflag, size = 0x4, scoped, tag = 'scoped memory for _ffn_call.1']
    #allocation4 [shape = 'u8[32768]{0}', space=vmem, size = 0x8000, scoped, tag = 'input window, operand 3, single buffered']
    #allocation5 [shape = 's32[1]{0}', space=sflag, size = 0x4, scoped, tag = 'scoped memory for _ffn_call.1']
    %10 = vsyncpa [#allocation3], 0
    %11 = vsyncpa [#allocation5], 0
    // Predicated region
    $region2: #{_ffn_call.1} parent=1 // pred_check
      _
    $region3: #{_ffn_call.1} parent=1 // pred_check_branch
      %13 = sbr.rel (0) target = $region5
    $region4: #{_ffn_call.1} parent=1 // pred_region
      _
    $region5: #{_ffn_call.1} parent=1 // pred_fallthru
      _
    // Predicated region
    $region6: #{_ffn_call.1} parent=1 // pred_check
      _
    $region7: #{_ffn_call.1} parent=1 // pred_check_branch
      %15 = sbr.rel (0) target = $region9
    $region8: #{_ffn_call.1} parent=1 // pred_region
      %s17 = ssub.s32 1024, 1024
      %18 = vsyncadd [#allocation3], %s17
      %s19 = sshll.u32 [#allocation2], 4
      %s20 = int_to_ptr.vmem [resolvable:$true] %s19
      %25 = dma.hbm_to_vmem [thread:$0]  %s1, 1024, %s20, [#allocation3], 64, 64, 4
    $region9: #{_ffn_call.1} parent=1 // pred_fallthru
      _
    // Predicated region
    $region10: #{_ffn_call.1} parent=1 // pred_check
      _
    $region11: #{_ffn_call.1} parent=1 // pred_check_branch
      %27 = sbr.rel (0) target = $region13
    $region12: #{_ffn_call.1} parent=1 // pred_region
      _
    $region13: #{_ffn_call.1} parent=1 // pred_fallthru
      _
    // Predicated region
    $region14: #{_ffn_call.1} parent=1 // pred_check
      _
    $region15: #{_ffn_call.1} parent=1 // pred_check_branch
      %29 = sbr.rel (0) target = $region17
    $region16: #{_ffn_call.1} parent=1 // pred_region
      %s31 = ssub.s32 1024, 1024
      %32 = vsyncadd [#allocation5], %s31
      %s33 = sshll.u32 [#allocation4], 4
      %s34 = int_to_ptr.vmem [resolvable:$true] %s33
      %39 = dma.hbm_to_vmem [thread:$0]  %s3, 1024, %s34, [#allocation5], 64, 64, 4
    $region17: #{_ffn_call.1} parent=1 // pred_fallthru
      _
    // Predicated region
    $region18: #{_ffn_call.1} parent=1 // pred_check
      _
    $region19: #{_ffn_call.1} parent=1 // pred_check_branch
      %41 = sbr.rel (0) target = $region21
    $region20: #{_ffn_call.1} parent=1 // pred_region
      _
    $region21: #{_ffn_call.1} parent=1 // pred_fallthru
      _
    // Predicated region
    $region22: #{_ffn_call.1} parent=1 // pred_check
      _
    $region23: #{_ffn_call.1} parent=1 // pred_check_branch
      %43 = sbr.rel (0) target = $region25
    $region24: #{_ffn_call.1} parent=1 // pred_region
      %44 = dma.done [#allocation3], 1024
    $region25: #{_ffn_call.1} parent=1 // pred_fallthru
      _
    // Predicated region
    $region26: #{_ffn_call.1} parent=1 // pred_check
      _
    $region27: #{_ffn_call.1} parent=1 // pred_check_branch
      %46 = sbr.rel (0) target = $region29
    $region28: #{_ffn_call.1} parent=1 // pred_region
      %47 = dma.done [#allocation5], 1024
    $region29: #{_ffn_call.1} parent=1 // pred_fallthru
      _
    %p49 = scmp.eq.s32.totalorder 0, 0
    // Predicated region
    $region30: #{_ffn_call.1} parent=1 // pred_check
      %p50 = pneg %p49
    $region31: #{_ffn_call.1} parent=1 // pred_check_branch
      %52 = sbr.rel (%p50) target = $region33
    $region32: #{_ffn_call.1} parent=1 // pred_region
      %53 = vst [vmem:[%s5] sm:$0xff] 0.0
      %54 = vst [vmem:[%s5 + $0x8] sm:$0xff] 0.0
    $region33: #{_ffn_call.1} parent=1 // pred_fallthru
      _
    %v55 = vld [vmem:[%s0] sm:$0xff]
    %v56 = vld [vmem:[%s0 + $0x8] sm:$0xff]
    %v57 = vpack.c.bf16 %v56, %v55
    %v58 = vld [vmem:[#allocation2] sm:$0xf]
    %v59 = vld [vmem:[#allocation2 + $0x4] sm:$0xf]
    %v60 = vld [vmem:[#allocation2 + $0x8] sm:$0xf]
    %v61 = vld [vmem:[#allocation2 + $0xc] sm:$0xf]
    %v62 = vld [vmem:[#allocation2 + $0x10] sm:$0xf]
    %v63 = vld [vmem:[#allocation2 + $0x14] sm:$0xf]
    %v64 = vld [vmem:[#allocation2 + $0x18] sm:$0xf]
    %v65 = vld [vmem:[#allocation2 + $0x1c] sm:$0xf]
    %v66 = vld [vmem:[#allocation2 + $0x20] sm:$0xf]
    %v67 = vld [vmem:[#allocation2 + $0x24] sm:$0xf]
    %v68 = vld [vmem:[#allocation2 + $0x28] sm:$0xf]
    %v69 = vld [vmem:[#allocation2 + $0x2c] sm:$0xf]
    %v70 = vld [vmem:[#allocation2 + $0x30] sm:$0xf]
    %v71 = vld [vmem:[#allocation2 + $0x34] sm:$0xf]
    %v72 = vld [vmem:[#allocation2 + $0x38] sm:$0xf]
    %v73 = vld [vmem:[#allocation2 + $0x3c] sm:$0xf]
    %v74 = vld [vmem:[%s2] sm:$0x1]
    %v76 = vlaneseq
    %v77 = vshrl.u32 %v76, 7
    %v78 = vsub.s32 0, %v77
    %v79 = vrot.slane %v74, %v78
    %v97 = vunpack.c.l.b16 %v58
    %v98 = vunpack.c.l.b16 %v59
    %v99 = vunpack.c.l.b16 %v60
    %v100 = vunpack.c.l.b16 %v61
    %v101 = vunpack.c.l.b16 %v62
    %v102 = vunpack.c.l.b16 %v63
    %v103 = vunpack.c.l.b16 %v64
    %v104 = vunpack.c.l.b16 %v65
    %v105 = vunpack.c.l.b16 %v66
    %v106 = vunpack.c.l.b16 %v67
    %v107 = vunpack.c.l.b16 %v68
    %v108 = vunpack.c.l.b16 %v69
    %v109 = vunpack.c.l.b16 %v70
    %v110 = vunpack.c.l.b16 %v71
    %v111 = vunpack.c.l.b16 %v72
    %v112 = vunpack.c.l.b16 %v73
    %v113 = vpack.c.b16 %v98, %v97
    %v114 = vpack.c.b16 %v100, %v99
    %v115 = vpack.c.b16 %v102, %v101
    %v116 = vpack.c.b16 %v104, %v103
    %v117 = vpack.c.b16 %v106, %v105
    %v118 = vpack.c.b16 %v108, %v107
    %v119 = vpack.c.b16 %v110, %v109
    %v120 = vpack.c.b16 %v112, %v111
    %129 = vmatprep.subr.bf16.mxu0 0
    %130 = vmatpush1.bf16.msra.mxu0 %v120
    %131 = vmatprep.subr.bf16.mxu0 0
    %132 = vmatpush1.bf16.msra.mxu0 %v119
    %133 = vmatprep.subr.bf16.mxu0 0
    %134 = vmatpush1.bf16.msra.mxu0 %v118
    %135 = vmatprep.subr.bf16.mxu0 0
    %136 = vmatpush1.bf16.msra.mxu0 %v117
    %137 = vmatprep.subr.bf16.mxu0 0
    %138 = vmatpush1.bf16.msra.mxu0 %v116
    %139 = vmatprep.subr.bf16.mxu0 0
    %140 = vmatpush1.bf16.msra.mxu0 %v115
    %141 = vmatprep.subr.bf16.mxu0 0
    %142 = vmatpush1.bf16.msra.mxu0 %v114
    %143 = vmatprep.subr.bf16.mxu0 0
    %144 = vmatpush1.bf16.msra.mxu0 %v113
    %145 = vmatprep.subr.bf16.mxu0 0
    %146 = vmatpush2.bf16.msra.mxu0 0
    %147 = vmatprep.subr.bf16.mxu0 0
    %148 = vmatpush2.bf16.msra.mxu0 0
    %149 = vmatprep.subr.bf16.mxu0 0
    %150 = vmatpush2.bf16.msra.mxu0 0
    %151 = vmatprep.subr.bf16.mxu0 0
    %152 = vmatpush2.bf16.msra.mxu0 0
    %153 = vmatprep.subr.bf16.mxu0 0
    %154 = vmatpush2.bf16.msra.mxu0 0
    %155 = vmatprep.subr.bf16.mxu0 0
    %156 = vmatpush2.bf16.msra.mxu0 0
    %157 = vmatprep.subr.bf16.mxu0 0
    %158 = vmatpush2.bf16.msra.mxu0 0
    %159 = vmatprep.subr.bf16.mxu0 0
    %160 = vmatpush2.bf16.msra.mxu0 0
    %161 = vmatprep.mubr.bf16.mxu0 0
    %162 = vmatmul.mubr.bf16.gmra.mxu0 %v57
    %v163 = vpop.f32.mrf.mxu0
    %v164 = vadd.f32 %v79, %v163
    %v165 = vpop.f32.mrf.mxu0
    %v166 = vpop.f32.mrf.mxu0
    %v167 = vadd.f32 %v79, %v166
    %v168 = vpop.f32.mrf.mxu0
    %169 = vdwg.mxu0
    %v170 = vmax.f32 %v164, 0.0
    %v171 = vmax.f32 %v167, 0.0
    %v172 = vld [vmem:[%s5] sm:$0xff]
    %v173 = vld [vmem:[%s5 + $0x8] sm:$0xff]
    %v174 = vpack.c.bf16 %v171, %v170
    %v175 = vld [vmem:[#allocation4] sm:$0xf]
    %v176 = vld [vmem:[#allocation4 + $0x4] sm:$0xf]
    %v177 = vld [vmem:[#allocation4 + $0x8] sm:$0xf]
    %v178 = vld [vmem:[#allocation4 + $0xc] sm:$0xf]
    %v179 = vld [vmem:[#allocation4 + $0x10] sm:$0xf]
    %v180 = vld [vmem:[#allocation4 + $0x14] sm:$0xf]
    %v181 = vld [vmem:[#allocation4 + $0x18] sm:$0xf]
    %v182 = vld [vmem:[#allocation4 + $0x1c] sm:$0xf]
    %v183 = vld [vmem:[#allocation4 + $0x20] sm:$0xf]
    %v184 = vld [vmem:[#allocation4 + $0x24] sm:$0xf]
    %v185 = vld [vmem:[#allocation4 + $0x28] sm:$0xf]
    %v186 = vld [vmem:[#allocation4 + $0x2c] sm:$0xf]
    %v187 = vld [vmem:[#allocation4 + $0x30] sm:$0xf]
    %v188 = vld [vmem:[#allocation4 + $0x34] sm:$0xf]
    %v189 = vld [vmem:[#allocation4 + $0x38] sm:$0xf]
    %v190 = vld [vmem:[#allocation4 + $0x3c] sm:$0xf]
    %v207 = vunpack.c.l.b16 %v175
    %v208 = vunpack.c.l.b16 %v176
    %v209 = vunpack.c.l.b16 %v177
    %v210 = vunpack.c.l.b16 %v178
    %v211 = vunpack.c.l.b16 %v179
    %v212 = vunpack.c.l.b16 %v180
    %v213 = vunpack.c.l.b16 %v181
    %v214 = vunpack.c.l.b16 %v182
    %v215 = vunpack.c.l.b16 %v183
    %v216 = vunpack.c.l.b16 %v184
    %v217 = vunpack.c.l.b16 %v185
    %v218 = vunpack.c.l.b16 %v186
    %v219 = vunpack.c.l.b16 %v187
    %v220 = vunpack.c.l.b16 %v188
    %v221 = vunpack.c.l.b16 %v189
    %v222 = vunpack.c.l.b16 %v190
    %v223 = vpack.c.b16 %v208, %v207
    %v224 = vpack.c.b16 %v210, %v209
    %v225 = vpack.c.b16 %v212, %v211
    %v226 = vpack.c.b16 %v214, %v213
    %v227 = vpack.c.b16 %v216, %v215
    %v228 = vpack.c.b16 %v218, %v217
    %v229 = vpack.c.b16 %v220, %v219
    %v230 = vpack.c.b16 %v222, %v221
    %239 = vmatprep.subr.bf16.mxu0 0
    %240 = vmatpush1.bf16.msra.mxu0 %v230
    %241 = vmatprep.subr.bf16.mxu0 0
    %242 = vmatpush1.bf16.msra.mxu0 %v229
    %243 = vmatprep.subr.bf16.mxu0 0
    %244 = vmatpush1.bf16.msra.mxu0 %v228
    %245 = vmatprep.subr.bf16.mxu0 0
    %246 = vmatpush1.bf16.msra.mxu0 %v227
    %247 = vmatprep.subr.bf16.mxu0 0
    %248 = vmatpush1.bf16.msra.mxu0 %v226
    %249 = vmatprep.subr.bf16.mxu0 0
    %250 = vmatpush1.bf16.msra.mxu0 %v225
    %251 = vmatprep.subr.bf16.mxu0 0
    %252 = vmatpush1.bf16.msra.mxu0 %v224
    %253 = vmatprep.subr.bf16.mxu0 0
    %254 = vmatpush1.bf16.msra.mxu0 %v223
    %255 = vmatprep.subr.bf16.mxu0 0
    %256 = vmatpush2.bf16.msra.mxu0 0
    %257 = vmatprep.subr.bf16.mxu0 0
    %258 = vmatpush2.bf16.msra.mxu0 0
    %259 = vmatprep.subr.bf16.mxu0 0
    %260 = vmatpush2.bf16.msra.mxu0 0
    %261 = vmatprep.subr.bf16.mxu0 0
    %262 = vmatpush2.bf16.msra.mxu0 0
    %263 = vmatprep.subr.bf16.mxu0 0
    %264 = vmatpush2.bf16.msra.mxu0 0
    %265 = vmatprep.subr.bf16.mxu0 0
    %266 = vmatpush2.bf16.msra.mxu0 0
    %267 = vmatprep.subr.bf16.mxu0 0
    %268 = vmatpush2.bf16.msra.mxu0 0
    %269 = vmatprep.subr.bf16.mxu0 0
    %270 = vmatpush2.bf16.msra.mxu0 0
    %271 = vmatprep.mubr.bf16.mxu0 0
    %272 = vmatmul.mubr.bf16.gmra.mxu0 %v174
    %v273 = vpop.f32.mrf.mxu0
    %v274 = vadd.f32 0.0, %v273
    %v275 = vpop.f32.mrf.mxu0
    %v276 = vpop.f32.mrf.mxu0
    %v277 = vadd.f32 0.0, %v276
    %v278 = vpop.f32.mrf.mxu0
    %279 = vdwg.mxu0
    %v280 = vadd.f32 %v172, %v274
    %v281 = vadd.f32 %v173, %v277
    %282 = vst [vmem:[%s5] sm:$0xff] %v280
    %283 = vst [vmem:[%s5 + $0x8] sm:$0xff] %v281
    // Predicated region
    $region34: #{_ffn_call.1} parent=1 // pred_check
      %p284 = pneg %p49
    $region35: #{_ffn_call.1} parent=1 // pred_check_branch
      %286 = sbr.rel (%p284) target = $region37
    $region36: #{_ffn_call.1} parent=1 // pred_region
      %v287 = vld [vmem:[%s5] sm:$0xff]
      %v288 = vld [vmem:[%s5 + $0x8] sm:$0xff]
      %v289 = vld [vmem:[%s4] sm:$0x1]
      %v291 = vlaneseq
      %v292 = vshrl.u32 %v291, 7
      %v293 = vsub.s32 0, %v292
      %v294 = vrot.slane %v289, %v293
      %v296 = vadd.f32 %v287, %v294
      %v297 = vadd.f32 %v288, %v294
      %298 = vst [vmem:[%s5] sm:$0xff] %v296
      %299 = vst [vmem:[%s5 + $0x8] sm:$0xff] %v297
    $region37: #{_ffn_call.1} parent=1 // pred_fallthru
      _
    // Predicated region
    $region38: #{_ffn_call.1} parent=1 // pred_check
      _
    $region39: #{_ffn_call.1} parent=1 // pred_check_branch
      %301 = sbr.rel (0) target = $region41
    $region40: #{_ffn_call.1} parent=1 // pred_region
      _
    $region41: #{_ffn_call.1} parent=1 // pred_fallthru
      _
    // Predicated region
    $region42: #{_ffn_call.1} parent=1 // pred_check
      _
    $region43: #{_ffn_call.1} parent=1 // pred_check_branch
      %303 = sbr.rel (0) target = $region45
    $region44: #{_ffn_call.1} parent=1 // pred_region
      _
    $region45: #{_ffn_call.1} parent=1 // pred_fallthru
      _
    %304 = vsyncpa [#allocation3], 1
    %305 = vsyncpa [#allocation5], 1

</llo_original>
